<compile_context>
chip_gen: v5e
topology: v5e:2x2
jax: 0.10.0
libtpu: 0.0.40
codegen_flags: <defaults>
</compile_context>

<pallas_src>
import math
from functools import partial

import jax
import jax.numpy as jnp
from jax.experimental import pallas as pl
from jax.experimental.pallas import tpu as pltpu


def _rup(x, m):
    return (x + m - 1) // m * m


def gat_kernel(nodes_ref, edges_ref, dist_ref, p_ref, out_ref, *,
               B, N, nF, eF, QK, nV, eV,
               r_wqkn, r_wev, r_wtn, r_wte, r_vec, eps):
    two_qk_nv = 2 * QK + nV
    two_nv = 2 * nV

    # ---- packed parameter slab: static, sublane-aligned slices (one input, one DMA) ----
    W_qkn = p_ref[r_wqkn:r_wqkn + nF, :two_qk_nv]      # (nF, 2*QK+nV), coeff folded into Q part
    W_ev = p_ref[r_wev:r_wev + eF, :eV]                # (eF, eV)
    W_t_n = p_ref[r_wtn:r_wtn + nV, :two_nv]           # (nV, 2*nV)   Trans rows for node-vals
    W_t_e = p_ref[r_wte:r_wte + eV, :two_nv]           # (eV, 2*nV)   Trans rows for edge-vals
    b_qkn = p_ref[r_vec + 0:r_vec + 1, :two_qk_nv]     # (1, 2*QK+nV)
    b_ev = p_ref[r_vec + 1:r_vec + 2, :eV]             # (1, eV)
    b_t = p_ref[r_vec + 2:r_vec + 3, :two_nv]          # (1, 2*nV)
    gamma = p_ref[r_vec + 3:r_vec + 4, :two_nv]        # (1, 2*nV)
    beta = p_ref[r_vec + 4:r_vec + 5, :two_nv]         # (1, 2*nV)

    # ---- fused Q|K|NV projection: one MXU matmul instead of three ----
    x = nodes_ref[...]                                             # (B*N, nF), flattened host-side
    proj = jnp.dot(x, W_qkn, preferred_element_type=jnp.float32) + b_qkn
    proj3 = proj.reshape(B, N, two_qk_nv)                          # split leading dim only
    Q3 = proj3[..., :QK]                                           # coeff already folded in
    K3 = proj3[..., QK:2 * QK]
    NV3 = proj3[..., 2 * QK:]

    # ---- attention weights: softmax_j( 1/(d+1) * coeff * (Q K^T) ) ----
    qk = jnp.einsum('bik,bjk->bij', Q3, K3,
                    preferred_element_type=jnp.float32)            # (B, N, N)
    distw = 1.0 / (dist_ref[...] + 1.0)                            # exact divide (correctness)
    s = qk * distw
    s_max = jnp.max(s, axis=-1, keepdims=True)
    e = jnp.exp(s - s_max)
    denom = jnp.sum(e, axis=-1, keepdims=True)
    attn = e / denom                                               # exact: sum_j attn == 1
    # No NaN scrub needed: without a mask the denominator is >= 1.

    # ---- node-value aggregation (MXU) ----
    valsN = jnp.einsum('bij,bjv->biv', attn, NV3,
                       preferred_element_type=jnp.float32).reshape(B * N, nV)

    # ---- edge-value aggregation: VPU broadcast-multiply of RAW edges + sublane reduce,
    #      then ONE EVNet projection.  (softmax rows sum to 1 -> bias added after.) ----
    attn_flat = attn.reshape(B * N, N)                             # leading-dim merge only
    wedges = jnp.sum(attn_flat[:, :, None] * edges_ref[...], axis=1)   # (B*N, eF)
    valsE = jnp.dot(wedges, W_ev, preferred_element_type=jnp.float32) + b_ev   # (B*N, eV)

    # ---- vals = relu(Trans(tanh(cat([valsN, valsE], -1)))) ----
    # concat avoided by a row-split of the Trans weight (tanh is elementwise).
    h = (jnp.dot(jnp.tanh(valsN), W_t_n, preferred_element_type=jnp.float32)
         + jnp.dot(jnp.tanh(valsE), W_t_e, preferred_element_type=jnp.float32)
         + b_t)
    h = jnp.maximum(h, 0.0)

    # ---- BatchNorm1d (training-mode batch stats, biased variance, affine) ----
    mean = jnp.mean(h, axis=0, keepdims=True)
    var = jnp.mean((h - mean) ** 2, axis=0, keepdims=True)
    hn = (h - mean) * jax.lax.rsqrt(var + eps)
    out_ref[...] = hn * gamma + beta


def _pack_param_slab(params, *, coeff, QK, nV, eV):
    """Pack all weights/biases/BN params into one lane-padded f32 slab (one DMA)."""
    wq = params['wq'] * coeff            # fold 1/sqrt(QKDims) into Q projection
    bq = params['bq'] * coeff
    nF = wq.shape[0]
    eF = params['wev'].shape[0]
    two_qk_nv = 2 * QK + nV
    two_nv = 2 * nV

    w_qkn = jnp.concatenate([wq, params['wk'], params['wnv']], axis=1)   # (nF, 2*QK+nV)
    b_qkn = jnp.concatenate([bq, params['bk'], params['bnv']])           # (2*QK+nV,)
    wt_n = params['wt'][:nV, :]                                          # (nV, 2*nV)
    wt_e = params['wt'][nV:, :]                                          # (eV, 2*nV)

    # 8-aligned row offsets -> all in-kernel weight slices are sublane-aligned.
    r_wqkn = 0
    r_wev = _rup(r_wqkn + nF, 8)
    r_wtn = _rup(r_wev + eF, 8)
    r_wte = _rup(r_wtn + nV, 8)
    r_vec = _rup(r_wte + eV, 8)
    R = _rup(r_vec + 5, 8)
    C = _rup(max(two_qk_nv, eV, two_nv), 128)

    slab = jnp.zeros((R, C), jnp.float32)
    slab = slab.at[r_wqkn:r_wqkn + nF, :two_qk_nv].set(w_qkn)
    slab = slab.at[r_wev:r_wev + eF, :eV].set(params['wev'])
    slab = slab.at[r_wtn:r_wtn + nV, :two_nv].set(wt_n)
    slab = slab.at[r_wte:r_wte + eV, :two_nv].set(wt_e)
    slab = slab.at[r_vec + 0, :two_qk_nv].set(b_qkn)
    slab = slab.at[r_vec + 1, :eV].set(params['bev'])
    slab = slab.at[r_vec + 2, :two_nv].set(params['bt'])
    slab = slab.at[r_vec + 3, :two_nv].set(params['gamma'])
    slab = slab.at[r_vec + 4, :two_nv].set(params['beta'])

    offs = dict(r_wqkn=r_wqkn, r_wev=r_wev, r_wtn=r_wtn, r_wte=r_wte, r_vec=r_vec)
    return slab, offs


def make_gat_forward(params, *, eps=1e-5):
    """Pack parameters ONCE and return a jitted forward(nodes, edges, distances)."""
    nF = params['wq'].shape[0]
    eF = params['wev'].shape[0]
    QK = params['wq'].shape[1]
    nV = params['wnv'].shape[1]
    eV = params['wev'].shape[1]
    coeff = 1.0 / math.sqrt(QK)

    # Built eagerly, one time; the jitted forward closes over the finished slab.
    slab, offs = _pack_param_slab(params, coeff=coeff, QK=QK, nV=nV, eV=eV)
    slab = jax.device_put(slab)

    vmem_spec = pl.BlockSpec(memory_space=pltpu.MemorySpace.VMEM)

    @jax.jit
    def forward(nodes, edges, distances):
        B, N, _ = nodes.shape
        # Host-side layout glue (free XLA reshapes; in-kernel reshapes only touch
        # leading dims, the lane dim is never split or merged in-kernel).
        nodes2d = nodes.reshape(B * N, nF)
        edges3 = edges.reshape(B * N, N, eF)

        kern = partial(gat_kernel, B=B, N=N, nF=nF, eF=eF, QK=QK, nV=nV, eV=eV,
                       eps=eps, **offs)

        out = pl.pallas_call(
            kern,
            out_shape=jax.ShapeDtypeStruct((B * N, 2 * nV), jnp.float32),
            # Single-shot kernel: no grid, no index_maps, no double-buffering.
            in_specs=[vmem_spec, vmem_spec, vmem_spec, vmem_spec],
            out_specs=vmem_spec,
        )(nodes2d, edges3, distances, slab)
        return out.reshape(B, N, 2 * nV)

    return forward


def gat_reference(nodes, edges, distances, params, *, eps=1e-5):
    """Literal pure-JAX port of the PyTorch module (training-mode BN, mask=None)."""
    B, N, nF = nodes.shape
    eF = edges.shape[-1]
    QK = params['wq'].shape[1]
    nV = params['wnv'].shape[1]
    eV = params['wev'].shape[1]
    coeff = 1.0 / math.sqrt(QK)

    n2 = nodes.reshape(-1, nF)
    e2 = edges.reshape(-1, eF)
    Q = (n2 @ params['wq'] + params['bq']).reshape(B, N, QK)
    K = (n2 @ params['wk'] + params['bk']).reshape(B, N, QK)
    NVp = (n2 @ params['wnv'] + params['bnv']).reshape(B, N, nV)
    NV4 = jnp.broadcast_to(NVp[:, None, :, :], (B, N, N, nV))
    EV4 = (e2 @ params['wev'] + params['bev']).reshape(B, N, N, eV)
    V = jnp.concatenate([NV4, EV4], axis=-1)

    distw = 1.0 / (distances + 1.0)
    qkw = jnp.einsum('bik,bjk->bij', Q, K)
    w = jax.nn.softmax(distw * qkw * coeff, axis=-1)
    vals = jnp.sum(w[..., None] * V, axis=-2)                       # (B, N, nV+eV)

    h = jnp.tanh(vals).reshape(B * N, nV + eV) @ params['wt'] + params['bt']
    h = jnp.maximum(h, 0.0)
    mean = h.mean(axis=0, keepdims=True)
    var = ((h - mean) ** 2).mean(axis=0, keepdims=True)
    hn = (h - mean) / jnp.sqrt(var + eps)
    out = hn * params['gamma'] + params['beta']
    return out.reshape(B, N, 2 * nV)


def init_params(key, nFeatures, eFeatures, QKDims, nValDims, eValDims):
    """Deterministic synthetic parameters (PyTorch Linear-style uniform init)."""
    ks = jax.random.split(key, 10)

    def linear(kw, kb, fan_in, fan_out):
        bound = 1.0 / math.sqrt(fan_in)
        w = jax.random.uniform(kw, (fan_in, fan_out), jnp.float32, -bound, bound)
        b = jax.random.uniform(kb, (fan_out,), jnp.float32, -bound, bound)
        return w, b

    wq, bq = linear(ks[0], ks[1], nFeatures, QKDims)
    wk, bk = linear(ks[2], ks[3], nFeatures, QKDims)
    wnv, bnv = linear(ks[4], ks[5], nFeatures, nValDims)
    wev, bev = linear(ks[6], ks[7], eFeatures, eValDims)
    wt, bt = linear(ks[8], ks[9], nValDims + eValDims, nValDims * 2)
    return {
        'wq': wq, 'bq': bq,
        'wk': wk, 'bk': bk,
        'wnv': wnv, 'bnv': bnv,
        'wev': wev, 'bev': bev,
        'wt': wt, 'bt': bt,
        'gamma': jnp.ones((nValDims * 2,), jnp.float32),
        'beta': jnp.zeros((nValDims * 2,), jnp.float32),
    }


if __name__ == "__main__":
    B, N = 2, 8
    nFeatures, eFeatures = 16, 8
    QKDims, nValDims, eValDims = 16, 16, 16

    key = jax.random.PRNGKey(0)
    k_params, k_nodes, k_edges, k_dist = jax.random.split(key, 4)

    params = init_params(k_params, nFeatures, eFeatures, QKDims, nValDims, eValDims)
    forward = make_gat_forward(params)   # parameter slab packed exactly once here

    nodes = jax.random.normal(k_nodes, (B, N, nFeatures), jnp.float32)
    edges = jax.random.normal(k_edges, (B, N, N, eFeatures), jnp.float32)
    distances = jax.random.uniform(k_dist, (B, N, N), jnp.float32, 0.0, 5.0)

    out = forward(nodes, edges, distances)
    out = jax.block_until_ready(out)

    assert out.shape == (B, N, 2 * nValDims)
    assert bool(jnp.all(jnp.isfinite(out)))

    ref = gat_reference(nodes, edges, distances, params)
    assert bool(jnp.allclose(out, ref, atol=2e-3, rtol=2e-3)), (
        f"max abs diff {float(jnp.max(jnp.abs(out - ref)))}")

    print("KERNEL_OK")
</pallas_src>

<mosaic_0001>
module attributes {stable_mosaic.version = 11 : i64} {
  func.func @gat_kernel(%arg0: memref<16x16xf32, #tpu.memory_space<vmem>>, %arg1: memref<16x8x8xf32, #tpu.memory_space<vmem>>, %arg2: memref<2x8x8xf32, #tpu.memory_space<vmem>>, %arg3: memref<64x128xf32, #tpu.memory_space<vmem>>, %arg4: memref<16x32xf32, #tpu.memory_space<vmem>>) attributes {dimension_semantics = [], scalar_prefetch = 0 : i64, scratch_operands = 0 : i64, tpu.core_type = #tpu.core_type<tc>} {
    %c0 = arith.constant 0 : index
    %c0_0 = arith.constant 0 : index
    %0 = vector.load %arg3[%c0, %c0_0] : memref<64x128xf32, #tpu.memory_space<vmem>>, vector<16x48xf32>
    %c16 = arith.constant 16 : index
    %c0_1 = arith.constant 0 : index
    %1 = vector.load %arg3[%c16, %c0_1] : memref<64x128xf32, #tpu.memory_space<vmem>>, vector<8x16xf32>
    %c24 = arith.constant 24 : index
    %c0_2 = arith.constant 0 : index
    %2 = vector.load %arg3[%c24, %c0_2] : memref<64x128xf32, #tpu.memory_space<vmem>>, vector<16x32xf32>
    %c40 = arith.constant 40 : index
    %c0_3 = arith.constant 0 : index
    %3 = vector.load %arg3[%c40, %c0_3] : memref<64x128xf32, #tpu.memory_space<vmem>>, vector<16x32xf32>
    %c56 = arith.constant 56 : index
    %c0_4 = arith.constant 0 : index
    %4 = vector.load %arg3[%c56, %c0_4] : memref<64x128xf32, #tpu.memory_space<vmem>>, vector<1x48xf32>
    %c57 = arith.constant 57 : index
    %c0_5 = arith.constant 0 : index
    %5 = vector.load %arg3[%c57, %c0_5] : memref<64x128xf32, #tpu.memory_space<vmem>>, vector<1x16xf32>
    %c58 = arith.constant 58 : index
    %c0_6 = arith.constant 0 : index
    %6 = vector.load %arg3[%c58, %c0_6] : memref<64x128xf32, #tpu.memory_space<vmem>>, vector<1x32xf32>
    %c59 = arith.constant 59 : index
    %c0_7 = arith.constant 0 : index
    %7 = vector.load %arg3[%c59, %c0_7] : memref<64x128xf32, #tpu.memory_space<vmem>>, vector<1x32xf32>
    %c60 = arith.constant 60 : index
    %c0_8 = arith.constant 0 : index
    %8 = vector.load %arg3[%c60, %c0_8] : memref<64x128xf32, #tpu.memory_space<vmem>>, vector<1x32xf32>
    %c0_9 = arith.constant 0 : index
    %c0_10 = arith.constant 0 : index
    %9 = vector.load %arg0[%c0_9, %c0_10] : memref<16x16xf32, #tpu.memory_space<vmem>>, vector<16x16xf32>
    %cst = arith.constant dense<0.000000e+00> : vector<16x48xf32>
    %10 = tpu.matmul %9, %0, %cst {dimension_numbers = #tpu.dot_dimension_numbers<[1], [0], [0], [1], [0, 0, 1, 1], [], []>} : vector<16x16xf32>, vector<16x48xf32>, vector<16x48xf32> -> vector<16x48xf32>
    %11 = vector.broadcast %4 : vector<1x48xf32> to vector<16x48xf32>
    %12 = arith.addf %10, %11 : vector<16x48xf32>
    %13 = vector.shape_cast %12 : vector<16x48xf32> to vector<2x8x48xf32>
    %14 = vector.extract_strided_slice %13 {offsets = [0, 0, 0], sizes = [2, 8, 16], strides = [1, 1, 1]} : vector<2x8x48xf32> to vector<2x8x16xf32>
    %15 = vector.extract_strided_slice %13 {offsets = [0, 0, 16], sizes = [2, 8, 16], strides = [1, 1, 1]} : vector<2x8x48xf32> to vector<2x8x16xf32>
    %16 = vector.extract_strided_slice %13 {offsets = [0, 0, 32], sizes = [2, 8, 16], strides = [1, 1, 1]} : vector<2x8x48xf32> to vector<2x8x16xf32>
    "tpu.trace_start"() <{level = 10 : i32, message = "bik,bjk->bij"}> : () -> ()
    %cst_11 = arith.constant dense<0.000000e+00> : vector<2x8x8xf32>
    %17 = tpu.matmul %14, %15, %cst_11 {dimension_numbers = #tpu.dot_dimension_numbers<[2], [2], [1], [1], [0, 0, 0, 1, 1, 1], [0], [0]>} : vector<2x8x16xf32>, vector<2x8x16xf32>, vector<2x8x8xf32> -> vector<2x8x8xf32>
    "tpu.trace_stop"() : () -> ()
    %c0_12 = arith.constant 0 : index
    %c0_13 = arith.constant 0 : index
    %c0_14 = arith.constant 0 : index
    %18 = vector.load %arg2[%c0_12, %c0_13, %c0_14] : memref<2x8x8xf32, #tpu.memory_space<vmem>>, vector<2x8x8xf32>
    %cst_15 = arith.constant 1.000000e+00 : f32
    %19 = vector.broadcast %cst_15 : f32 to vector<2x8x8xf32>
    %20 = arith.addf %18, %19 : vector<2x8x8xf32>
    %cst_16 = arith.constant 1.000000e+00 : f32
    %21 = vector.broadcast %cst_16 : f32 to vector<2x8x8xf32>
    %22 = arith.divf %21, %20 : vector<2x8x8xf32>
    %23 = arith.mulf %17, %22 : vector<2x8x8xf32>
    %cst_17 = arith.constant dense<0xFF800000> : vector<2x8xf32>
    %24 = vector.multi_reduction <maximumf>, %23, %cst_17 [2] : vector<2x8x8xf32> to vector<2x8xf32>
    %25 = vector.shape_cast %24 : vector<2x8xf32> to vector<2x8x1xf32>
    %26 = vector.broadcast %25 : vector<2x8x1xf32> to vector<2x8x8xf32>
    %27 = arith.subf %23, %26 : vector<2x8x8xf32>
    %28 = math.exp %27 : vector<2x8x8xf32>
    %cst_18 = arith.constant dense<0.000000e+00> : vector<2x8xf32>
    %29 = vector.multi_reduction <add>, %28, %cst_18 [2] : vector<2x8x8xf32> to vector<2x8xf32>
    %30 = vector.shape_cast %29 : vector<2x8xf32> to vector<2x8x1xf32>
    %31 = vector.broadcast %30 : vector<2x8x1xf32> to vector<2x8x8xf32>
    %32 = arith.divf %28, %31 : vector<2x8x8xf32>
    "tpu.trace_start"() <{level = 10 : i32, message = "bij,bjv->biv"}> : () -> ()
    %cst_19 = arith.constant dense<0.000000e+00> : vector<2x8x16xf32>
    %33 = tpu.matmul %32, %16, %cst_19 {dimension_numbers = #tpu.dot_dimension_numbers<[2], [1], [1], [2], [0, 0, 0, 1, 1, 2], [0], [0]>} : vector<2x8x8xf32>, vector<2x8x16xf32>, vector<2x8x16xf32> -> vector<2x8x16xf32>
    "tpu.trace_stop"() : () -> ()
    %34 = vector.shape_cast %33 : vector<2x8x16xf32> to vector<16x16xf32>
    %35 = vector.shape_cast %32 : vector<2x8x8xf32> to vector<16x8xf32>
    %36 = vector.shape_cast %35 : vector<16x8xf32> to vector<16x8x1xf32>
    %c0_20 = arith.constant 0 : index
    %c0_21 = arith.constant 0 : index
    %c0_22 = arith.constant 0 : index
    %37 = vector.load %arg1[%c0_20, %c0_21, %c0_22] : memref<16x8x8xf32, #tpu.memory_space<vmem>>, vector<16x8x8xf32>
    %38 = vector.broadcast %36 : vector<16x8x1xf32> to vector<16x8x8xf32>
    %39 = arith.mulf %38, %37 : vector<16x8x8xf32>
    %cst_23 = arith.constant dense<0.000000e+00> : vector<16x8xf32>
    %40 = vector.multi_reduction <add>, %39, %cst_23 [1] : vector<16x8x8xf32> to vector<16x8xf32>
    %cst_24 = arith.constant dense<0.000000e+00> : vector<16x16xf32>
    %41 = tpu.matmul %40, %1, %cst_24 {dimension_numbers = #tpu.dot_dimension_numbers<[1], [0], [0], [1], [0, 0, 1, 1], [], []>} : vector<16x8xf32>, vector<8x16xf32>, vector<16x16xf32> -> vector<16x16xf32>
    %42 = vector.broadcast %5 : vector<1x16xf32> to vector<16x16xf32>
    %43 = arith.addf %41, %42 : vector<16x16xf32>
    %44 = math.tanh %34 : vector<16x16xf32>
    %cst_25 = arith.constant dense<0.000000e+00> : vector<16x32xf32>
    %45 = tpu.matmul %44, %2, %cst_25 {dimension_numbers = #tpu.dot_dimension_numbers<[1], [0], [0], [1], [0, 0, 1, 1], [], []>} : vector<16x16xf32>, vector<16x32xf32>, vector<16x32xf32> -> vector<16x32xf32>
    %46 = math.tanh %43 : vector<16x16xf32>
    %cst_26 = arith.constant dense<0.000000e+00> : vector<16x32xf32>
    %47 = tpu.matmul %46, %3, %cst_26 {dimension_numbers = #tpu.dot_dimension_numbers<[1], [0], [0], [1], [0, 0, 1, 1], [], []>} : vector<16x16xf32>, vector<16x32xf32>, vector<16x32xf32> -> vector<16x32xf32>
    %48 = arith.addf %45, %47 : vector<16x32xf32>
    %49 = vector.broadcast %6 : vector<1x32xf32> to vector<16x32xf32>
    %50 = arith.addf %48, %49 : vector<16x32xf32>
    %cst_27 = arith.constant 0.000000e+00 : f32
    %51 = vector.broadcast %cst_27 : f32 to vector<16x32xf32>
    %52 = arith.maximumf %50, %51 : vector<16x32xf32>
    %cst_28 = arith.constant dense<0.000000e+00> : vector<32xf32>
    %53 = vector.multi_reduction <add>, %52, %cst_28 [0] : vector<16x32xf32> to vector<32xf32>
    %54 = vector.shape_cast %53 : vector<32xf32> to vector<1x32xf32>
    %cst_29 = arith.constant 1.600000e+01 : f32
    %55 = vector.broadcast %cst_29 : f32 to vector<1x32xf32>
    %56 = arith.divf %54, %55 : vector<1x32xf32>
    %57 = vector.broadcast %56 : vector<1x32xf32> to vector<16x32xf32>
    %58 = arith.subf %52, %57 : vector<16x32xf32>
    %59 = arith.mulf %58, %58 : vector<16x32xf32>
    %cst_30 = arith.constant dense<0.000000e+00> : vector<32xf32>
    %60 = vector.multi_reduction <add>, %59, %cst_30 [0] : vector<16x32xf32> to vector<32xf32>
    %61 = vector.shape_cast %60 : vector<32xf32> to vector<1x32xf32>
    %cst_31 = arith.constant 1.600000e+01 : f32
    %62 = vector.broadcast %cst_31 : f32 to vector<1x32xf32>
    %63 = arith.divf %61, %62 : vector<1x32xf32>
    %64 = vector.broadcast %56 : vector<1x32xf32> to vector<16x32xf32>
    %65 = arith.subf %52, %64 : vector<16x32xf32>
    %cst_32 = arith.constant 9.99999974E-6 : f32
    %66 = vector.broadcast %cst_32 : f32 to vector<1x32xf32>
    %67 = arith.addf %63, %66 : vector<1x32xf32>
    %68 = math.rsqrt %67 : vector<1x32xf32>
    %69 = vector.broadcast %68 : vector<1x32xf32> to vector<16x32xf32>
    %70 = arith.mulf %65, %69 : vector<16x32xf32>
    %71 = vector.broadcast %7 : vector<1x32xf32> to vector<16x32xf32>
    %72 = arith.mulf %70, %71 : vector<16x32xf32>
    %73 = vector.broadcast %8 : vector<1x32xf32> to vector<16x32xf32>
    %74 = arith.addf %72, %73 : vector<16x32xf32>
    %c0_33 = arith.constant 0 : index
    %c0_34 = arith.constant 0 : index
    %75 = vector.load %arg4[%c0_33, %c0_34] : memref<16x32xf32, #tpu.memory_space<vmem>>, vector<16x32xf32>
    tpu.vector_store %arg4[%c0_33, %c0_34], %74 {strides = array<i32>} : memref<16x32xf32, #tpu.memory_space<vmem>>, vector<16x32xf32>,
    return
  }
}

</mosaic_0001>

<llo_original>
// kernel: forward.1
$region0: #{forward.1}
  #allocation0 [shape = 'u32[]', space=smem, size = 0x4, offset = 0x4, fixed_abs, tag = 'smem constant byte address 0x4 - core index']
  #allocation1 [shape = 'u32[72,128]{1,0:T(1,128)}', space=vmem, size = 0x9000, scoped, tag = 'internal scratch']
  %s0 = inlined_call_operand.hbm [shape: f32[16,16], index: 0, kind: input, shape index: {}]
  %s1 = inlined_call_operand.hbm [shape: f32[16,8,8], index: 1, kind: input, shape index: {}]
  %s2 = inlined_call_operand.hbm [shape: f32[2,8,8], index: 2, kind: input, shape index: {}]
  %s3 = inlined_call_operand.hbm [shape: f32[64,128], index: 3, kind: input, shape index: {}]
  %s4 = inlined_call_operand.hbm [shape: f32[16,32], index: 4, kind: output, shape index: {}]
  %s5 = sld [smem:[#allocation0]]
  $region42: #{forward.1} parent=0
    _
  %s7 = ssub.s32 1, %s5
  %s8 = scalar_select 0, %s7, %s5
  $region1: #{forward.1} parent=0
    #allocation2 [shape = 'u8[8192]{0}', space=vmem, size = 0x2000, scoped, tag = 'input window, operand 0, single buffered']
    #allocation3 [shape = 's32[1]{0}', space=sflag, size = 0x4, scoped, tag = 'scoped memory for forward.1']
    #allocation4 [shape = 's32[1]{0}', space=sflag, size = 0x4, scoped, tag = 'scoped memory for forward.1']
    #allocation5 [shape = 'u8[65536]{0}', space=vmem, size = 0x10000, scoped, tag = 'input window, operand 1, single buffered']
    #allocation6 [shape = 's32[1]{0}', space=sflag, size = 0x4, scoped, tag = 'scoped memory for forward.1']
    #allocation7 [shape = 'u8[8192]{0}', space=vmem, size = 0x2000, scoped, tag = 'input window, operand 2, single buffered']
    #allocation8 [shape = 'u8[32768]{0}', space=vmem, size = 0x8000, scoped, tag = 'input window, operand 3, single buffered']
    #allocation9 [shape = 's32[1]{0}', space=sflag, size = 0x4, scoped, tag = 'scoped memory for forward.1']
    #allocation10 [shape = 'u8[8192]{0}', space=vmem, size = 0x2000, scoped, tag = 'output window, operand 0, single buffered']
    %9 = vsyncpa [#allocation3], 0
    %10 = vsyncpa [#allocation6], 0
    %11 = vsyncpa [#allocation9], 0
    %12 = vsyncpa [#allocation4], 0
    // Predicated region
    $region2: #{forward.1} parent=1 // pred_check
      _
    $region3: #{forward.1} parent=1 // pred_check_branch
      %14 = sbr.rel (0) target = $region5
    $region4: #{forward.1} parent=1 // pred_region
      %16 = vsyncadd [#allocation3], 0
      %s17 = sshll.u32 %s0, 4
      %s18 = int_to_ptr.hbm [resolvable:$true] %s17
      %s19 = sshll.u32 [#allocation2], 4
      %s20 = int_to_ptr.vmem [resolvable:$true] %s19
      %25 = dma.hbm_to_vmem [thread:$0]  %s18, 256, %s20, [#allocation3], 128, 128, 8
    $region5: #{forward.1} parent=1 // pred_fallthru
      _
    // Predicated region
    $region6: #{forward.1} parent=1 // pred_check
      _
    $region7: #{forward.1} parent=1 // pred_check_branch
      %27 = sbr.rel (0) target = $region9
    $region8: #{forward.1} parent=1 // pred_region
      %29 = vsyncadd [#allocation6], 0
      %s30 = sshll.u32 %s1, 4
      %s31 = int_to_ptr.hbm [resolvable:$true] %s30
      %s32 = sshll.u32 [#allocation5], 4
      %s33 = int_to_ptr.vmem [resolvable:$true] %s32
      %38 = dma.hbm_to_vmem [thread:$0]  %s31, 2048, %s33, [#allocation6], 128, 128, 8
    $region9: #{forward.1} parent=1 // pred_fallthru
      _
    // Predicated region
    $region10: #{forward.1} parent=1 // pred_check
      _
    $region11: #{forward.1} parent=1 // pred_check_branch
      %40 = sbr.rel (0) target = $region13
    $region12: #{forward.1} parent=1 // pred_region
      %42 = vsyncadd [#allocation6], 0
      %s43 = sshll.u32 %s2, 4
      %s44 = int_to_ptr.hbm [resolvable:$true] %s43
      %s45 = sshll.u32 [#allocation7], 4
      %s46 = int_to_ptr.vmem [resolvable:$true] %s45
      %51 = dma.hbm_to_vmem [thread:$0]  %s44, 256, %s46, [#allocation6], 128, 128, 8
    $region13: #{forward.1} parent=1 // pred_fallthru
      _
    // Predicated region
    $region14: #{forward.1} parent=1 // pred_check
      _
    $region15: #{forward.1} parent=1 // pred_check_branch
      %53 = sbr.rel (0) target = $region17
    $region16: #{forward.1} parent=1 // pred_region
      %55 = vsyncadd [#allocation9], 0
      %s56 = sshll.u32 %s3, 4
      %s57 = int_to_ptr.hbm [resolvable:$true] %s56
      %s58 = sshll.u32 [#allocation8], 4
      %s59 = int_to_ptr.vmem [resolvable:$true] %s58
      %64 = dma.hbm_to_vmem [thread:$0]  %s57, 1024, %s59, [#allocation9], 128, 128, 8
    $region17: #{forward.1} parent=1 // pred_fallthru
      _
    // Predicated region
    $region18: #{forward.1} parent=1 // pred_check
      _
    $region19: #{forward.1} parent=1 // pred_check_branch
      %66 = sbr.rel (0) target = $region21
    $region20: #{forward.1} parent=1 // pred_region
      %68 = dma.done [#allocation3], 256
    $region21: #{forward.1} parent=1 // pred_fallthru
      _
    // Predicated region
    $region22: #{forward.1} parent=1 // pred_check
      _
    $region23: #{forward.1} parent=1 // pred_check_branch
      %70 = sbr.rel (0) target = $region25
    $region24: #{forward.1} parent=1 // pred_region
      %72 = dma.done [#allocation6], 2048
    $region25: #{forward.1} parent=1 // pred_fallthru
      _
    // Predicated region
    $region26: #{forward.1} parent=1 // pred_check
      _
    $region27: #{forward.1} parent=1 // pred_check_branch
      %74 = sbr.rel (0) target = $region29
    $region28: #{forward.1} parent=1 // pred_region
      %76 = dma.done [#allocation6], 256
    $region29: #{forward.1} parent=1 // pred_fallthru
      _
    // Predicated region
    $region30: #{forward.1} parent=1 // pred_check
      _
    $region31: #{forward.1} parent=1 // pred_check_branch
      %78 = sbr.rel (0) target = $region33
    $region32: #{forward.1} parent=1 // pred_region
      %80 = dma.done [#allocation9], 1024
    $region33: #{forward.1} parent=1 // pred_fallthru
      _
    %v81 = vld [vmem:[#allocation8] sm:$0xff]
    %v82 = vld [vmem:[#allocation8 + $0x8] sm:$0xff]
    %v83 = vld [vmem:[#allocation8 + $0x10] sm:$0xff]
    %v84 = vld [vmem:[#allocation8 + $0x18] sm:$0xff]
    %v85 = vld [vmem:[#allocation8 + $0x20] sm:$0xff]
    %v86 = vld [vmem:[#allocation8 + $0x28] sm:$0xff]
    %v87 = vld [vmem:[#allocation8 + $0x30] sm:$0xff]
    %v88 = vld [vmem:[#allocation8 + $0x38] sm:$0x1]
    %v89 = vld [vmem:[#allocation8 + $0x39] sm:$0x1]
    %v90 = vld [vmem:[#allocation8 + $0x3a] sm:$0x1]
    %v91 = vld [vmem:[#allocation8 + $0x3b] sm:$0x1]
    %v92 = vld [vmem:[#allocation8 + $0x3c] sm:$0x1]
    %v93 = vld [vmem:[#allocation2] sm:$0xff]
    %v94 = vld [vmem:[#allocation2 + $0x8] sm:$0xff]
    %v95 = vperm.slane %v88, 0
    %vm96 = vcmask 130048
    %v98 = vsel %vm96, %v93, 0
    %v101 = vsel %vm96, %v94, 0
    %103 = vmatpush.msra.mxu0 0.0
    %104 = vmatpush.msra.mxu0 0.0
    %105 = vmatpush.msra.mxu0 0.0
    %106 = vmatpush.msra.mxu0 0.0
    %107 = vmatpush.msra.mxu0 0.0
    %108 = vmatpush.msra.mxu0 0.0
    %109 = vmatpush.msra.mxu0 0.0
    %110 = vmatpush.msra.mxu0 0.0
    %111 = vmatpush.msra.mxu0 0.0
    %112 = vmatpush.msra.mxu0 0.0
    %113 = vmatpush.msra.mxu0 0.0
    %114 = vmatpush.msra.mxu0 0.0
    %115 = vmatpush.msra.mxu0 0.0
    %116 = vmatpush.msra.mxu0 0.0
    %117 = vmatpush.msra.mxu0 %v82
    %118 = vmatpush.msra.mxu0 %v81
    %119 = vmatmul.f32.gmra.mxu0 %v98
    %v120 = vpop.f32.mrf.mxu0
    %v121 = vadd.f32 %v95, %v120
    %122 = vmatmul.f32.gmra.mxu0 %v101
    %v123 = vpop.f32.mrf.mxu0
    %v124 = vadd.f32 %v95, %v123
    %125 = vdwg.mxu0
    %127 = vrot.lane.b32.xlu0 %v121, 112
    %v128 = vpop.permute.xlu0 %127
    %v129 = vsel %vm96, %v121, 0
    %v131 = vsel %vm96, %v128, 0
    %133 = vmatpush.xpose.msra.mxu0 0.0
    %134 = vmatpush.xpose.msra.mxu0 0.0
    %135 = vmatpush.xpose.msra.mxu0 0.0
    %136 = vmatpush.xpose.msra.mxu0 0.0
    %137 = vmatpush.xpose.msra.mxu0 0.0
    %138 = vmatpush.xpose.msra.mxu0 0.0
    %139 = vmatpush.xpose.msra.mxu0 0.0
    %140 = vmatpush.xpose.msra.mxu0 0.0
    %141 = vmatpush.xpose.msra.mxu0 0.0
    %142 = vmatpush.xpose.msra.mxu0 0.0
    %143 = vmatpush.xpose.msra.mxu0 0.0
    %144 = vmatpush.xpose.msra.mxu0 0.0
    %145 = vmatpush.xpose.msra.mxu0 0.0
    %146 = vmatpush.xpose.msra.mxu0 0.0
    %147 = vmatpush.xpose.msra.mxu0 0.0
    %148 = vmatpush.xpose.msra.mxu0 %v131
    %149 = vmatmul.f32.gmra.mxu0 %v129
    %v150 = vpop.f32.mrf.mxu0
    %v151 = vadd.f32 0.0, %v150
    %152 = vdwg.mxu0
    %154 = vrot.lane.b32.xlu0 %v124, 112
    %v155 = vpop.permute.xlu0 %154
    %v156 = vsel %vm96, %v124, 0
    %v158 = vsel %vm96, %v155, 0
    %160 = vmatpush.xpose.msra.mxu0 0.0
    %161 = vmatpush.xpose.msra.mxu0 0.0
    %162 = vmatpush.xpose.msra.mxu0 0.0
    %163 = vmatpush.xpose.msra.mxu0 0.0
    %164 = vmatpush.xpose.msra.mxu0 0.0
    %165 = vmatpush.xpose.msra.mxu0 0.0
    %166 = vmatpush.xpose.msra.mxu0 0.0
    %167 = vmatpush.xpose.msra.mxu0 0.0
    %168 = vmatpush.xpose.msra.mxu0 0.0
    %169 = vmatpush.xpose.msra.mxu0 0.0
    %170 = vmatpush.xpose.msra.mxu0 0.0
    %171 = vmatpush.xpose.msra.mxu0 0.0
    %172 = vmatpush.xpose.msra.mxu0 0.0
    %173 = vmatpush.xpose.msra.mxu0 0.0
    %174 = vmatpush.xpose.msra.mxu0 0.0
    %175 = vmatpush.xpose.msra.mxu0 %v158
    %176 = vmatmul.f32.gmra.mxu0 %v156
    %v177 = vpop.f32.mrf.mxu0
    %v178 = vadd.f32 0.0, %v177
    %179 = vdwg.mxu0
    %v180 = vld [vmem:[#allocation7] sm:$0xff]
    %v181 = vld [vmem:[#allocation7 + $0x8] sm:$0xff]
    %v182 = vadd.f32 %v180, 1.0
    %v183 = vadd.f32 %v181, 1.0
    %v184 = vrcp.pop %v182
    %v185 = vmul.f32 %v182, %v184
    %v186 = vsub.f32 1.0, %v185
    %v187 = vmul.f32 %v184, %v186
    %v188 = vadd.f32 %v184, %v187
    %vm189 = vweird.f32 %v182
    %vm190 = vweird.f32 %v184
    %vm191 = vmor %vm189, %vm190
    %v192 = vsel %vm191, %v184, %v188
    %v193 = vand.u32 2147483647, %v182
    %vm194 = vcmp.eq.f32.partialorder %v193, 8.507059e+37
    %v195 = vand.u32 %v182, 2147483648
    %v196 = vor.u32 1.1754944e-38, %v195
    %v197 = vsel %vm194, %v196, %v192
    %v198 = vmul.f32 1.0, %v197
    %v199 = vrcp.pop %v183
    %v200 = vmul.f32 %v183, %v199
    %v201 = vsub.f32 1.0, %v200
    %v202 = vmul.f32 %v199, %v201
    %v203 = vadd.f32 %v199, %v202
    %vm204 = vweird.f32 %v183
    %vm205 = vweird.f32 %v199
    %vm206 = vmor %vm204, %vm205
    %v207 = vsel %vm206, %v199, %v203
    %v208 = vand.u32 2147483647, %v183
    %vm209 = vcmp.eq.f32.partialorder %v208, 8.507059e+37
    %v210 = vand.u32 %v183, 2147483648
    %v211 = vor.u32 1.1754944e-38, %v210
    %v212 = vsel %vm209, %v211, %v207
    %v213 = vmul.f32 1.0, %v212
    %v214 = vmul.f32 %v151, %v198
    %v215 = vmul.f32 %v178, %v213
    %vm216 = vcmask 64512
    %v217 = vsel %vm216, %v214, -inf
    %218 = vmax.xlane.f32.xlu0 %v217
    %v219 = vpop.xlane.xlu0 %218
    %v220 = vsel %vm216, %v215, -inf
    %221 = vmax.xlane.f32.xlu0 %v220
    %v222 = vpop.xlane.xlu0 %221
    %v223 = vsub.f32 %v214, %v219
    %v224 = vsub.f32 %v215, %v222
    %v225 = vmul.f32 %v223, 1.442695
    %v226 = vpow.pop %v225
    %v227 = vmul.f32 %v224, 1.442695
    %v228 = vpow.pop %v227
    %v229 = vsel %vm216, %v226, 0.0
    %230 = vadd.xlane.f32.xlu0 %v229
    %v231 = vpop.xlane.xlu0 %230
    %v232 = vsel %vm216, %v228, 0.0
    %233 = vadd.xlane.f32.xlu0 %v232
    %v234 = vpop.xlane.xlu0 %233
    %v235 = vrcp.pop %v231
    %v236 = vmul.f32 %v231, %v235
    %v237 = vsub.f32 1.0, %v236
    %v238 = vmul.f32 %v235, %v237
    %v239 = vadd.f32 %v235, %v238
    %vm240 = vweird.f32 %v231
    %vm241 = vweird.f32 %v235
    %vm242 = vmor %vm240, %vm241
    %v243 = vsel %vm242, %v235, %v239
    %v244 = vand.u32 2147483647, %v231
    %vm245 = vcmp.eq.f32.partialorder %v244, 8.507059e+37
    %v246 = vand.u32 %v231, 2147483648
    %v247 = vor.u32 1.1754944e-38, %v246
    %v248 = vsel %vm245, %v247, %v243
    %v249 = vmul.f32 %v226, %v248
    %v250 = vrcp.pop %v234
    %v251 = vmul.f32 %v234, %v250
    %v252 = vsub.f32 1.0, %v251
    %v253 = vmul.f32 %v250, %v252
    %v254 = vadd.f32 %v250, %v253
    %vm255 = vweird.f32 %v234
    %vm256 = vweird.f32 %v250
    %vm257 = vmor %vm255, %vm256
    %v258 = vsel %vm257, %v250, %v254
    %v259 = vand.u32 2147483647, %v234
    %vm260 = vcmp.eq.f32.partialorder %v259, 8.507059e+37
    %v261 = vand.u32 %v234, 2147483648
    %v262 = vor.u32 1.1754944e-38, %v261
    %v263 = vsel %vm260, %v262, %v258
    %v264 = vmul.f32 %v228, %v263
    %265 = vrot.lane.b32.xlu0 %v121, 96
    %v266 = vpop.permute.xlu0 %265
    %v269 = vsel %vm216, %v249, 0
    %271 = vmatpush.msra.mxu0 0.0
    %272 = vmatpush.msra.mxu0 0.0
    %273 = vmatpush.msra.mxu0 0.0
    %274 = vmatpush.msra.mxu0 0.0
    %275 = vmatpush.msra.mxu0 0.0
    %276 = vmatpush.msra.mxu0 0.0
    %277 = vmatpush.msra.mxu0 0.0
    %278 = vmatpush.msra.mxu0 0.0
    %279 = vmatpush.msra.mxu0 0.0
    %280 = vmatpush.msra.mxu0 0.0
    %281 = vmatpush.msra.mxu0 0.0
    %282 = vmatpush.msra.mxu0 0.0
    %283 = vmatpush.msra.mxu0 0.0
    %284 = vmatpush.msra.mxu0 0.0
    %285 = vmatpush.msra.mxu0 0.0
    %286 = vmatpush.msra.mxu0 %v266
    %287 = vmatmul.f32.gmra.mxu0 %v269
    %v288 = vpop.f32.mrf.mxu0
    %v289 = vadd.f32 0.0, %v288
    %290 = vdwg.mxu0
    %291 = vrot.lane.b32.xlu0 %v124, 96
    %v292 = vpop.permute.xlu0 %291
    %v295 = vsel %vm216, %v264, 0
    %297 = vmatpush.msra.mxu0 0.0
    %298 = vmatpush.msra.mxu0 0.0
    %299 = vmatpush.msra.mxu0 0.0
    %300 = vmatpush.msra.mxu0 0.0
    %301 = vmatpush.msra.mxu0 0.0
    %302 = vmatpush.msra.mxu0 0.0
    %303 = vmatpush.msra.mxu0 0.0
    %304 = vmatpush.msra.mxu0 0.0
    %305 = vmatpush.msra.mxu0 0.0
    %306 = vmatpush.msra.mxu0 0.0
    %307 = vmatpush.msra.mxu0 0.0
    %308 = vmatpush.msra.mxu0 0.0
    %309 = vmatpush.msra.mxu0 0.0
    %310 = vmatpush.msra.mxu0 0.0
    %311 = vmatpush.msra.mxu0 0.0
    %312 = vmatpush.msra.mxu0 %v292
    %313 = vmatmul.f32.gmra.mxu0 %v295
    %v314 = vpop.f32.mrf.mxu0
    %v315 = vadd.f32 0.0, %v314
    %316 = vdwg.mxu0
    %v317 = vperm.slane %v249, 0
    %v318 = vlaneseq
    %v319 = vshrl.u32 %v318, 7
    %321 = vset.pattern.permute.xlu0 %v319
    %322 = vperm.xlu0 %321, %v317
    %v323 = vpop.permute.xlu0 %322
    %v324 = vperm.slane %v249, 1
    %v325 = vlaneseq
    %v326 = vshrl.u32 %v325, 7
    %328 = vset.pattern.permute.xlu0 %v326
    %329 = vperm.xlu0 %328, %v324
    %v330 = vpop.permute.xlu0 %329
    %v331 = vperm.slane %v249, 2
    %v332 = vlaneseq
    %v333 = vshrl.u32 %v332, 7
    %335 = vset.pattern.permute.xlu0 %v333
    %336 = vperm.xlu0 %335, %v331
    %v337 = vpop.permute.xlu0 %336
    %v338 = vperm.slane %v249, 3
    %v339 = vlaneseq
    %v340 = vshrl.u32 %v339, 7
    %342 = vset.pattern.permute.xlu0 %v340
    %343 = vperm.xlu0 %342, %v338
    %v344 = vpop.permute.xlu0 %343
    %v345 = vperm.slane %v249, 4
    %v346 = vlaneseq
    %v347 = vshrl.u32 %v346, 7
    %349 = vset.pattern.permute.xlu0 %v347
    %350 = vperm.xlu0 %349, %v345
    %v351 = vpop.permute.xlu0 %350
    %v352 = vperm.slane %v249, 5
    %v353 = vlaneseq
    %v354 = vshrl.u32 %v353, 7
    %356 = vset.pattern.permute.xlu0 %v354
    %357 = vperm.xlu0 %356, %v352
    %v358 = vpop.permute.xlu0 %357
    %v359 = vperm.slane %v249, 6
    %v360 = vlaneseq
    %v361 = vshrl.u32 %v360, 7
    %363 = vset.pattern.permute.xlu0 %v361
    %364 = vperm.xlu0 %363, %v359
    %v365 = vpop.permute.xlu0 %364
    %v366 = vperm.slane %v249, 7
    %v367 = vlaneseq
    %v368 = vshrl.u32 %v367, 7
    %370 = vset.pattern.permute.xlu0 %v368
    %371 = vperm.xlu0 %370, %v366
    %v372 = vpop.permute.xlu0 %371
    %v373 = vperm.slane %v264, 0
    %v374 = vlaneseq
    %v375 = vshrl.u32 %v374, 7
    %377 = vset.pattern.permute.xlu0 %v375
    %378 = vperm.xlu0 %377, %v373
    %v379 = vpop.permute.xlu0 %378
    %v380 = vperm.slane %v264, 1
    %v381 = vlaneseq
    %v382 = vshrl.u32 %v381, 7
    %384 = vset.pattern.permute.xlu0 %v382
    %385 = vperm.xlu0 %384, %v380
    %v386 = vpop.permute.xlu0 %385
    %v387 = vperm.slane %v264, 2
    %v388 = vlaneseq
    %v389 = vshrl.u32 %v388, 7
    %391 = vset.pattern.permute.xlu0 %v389
    %392 = vperm.xlu0 %391, %v387
    %v393 = vpop.permute.xlu0 %392
    %v394 = vperm.slane %v264, 3
    %v395 = vlaneseq
    %v396 = vshrl.u32 %v395, 7
    %398 = vset.pattern.permute.xlu0 %v396
    %399 = vperm.xlu0 %398, %v394
    %v400 = vpop.permute.xlu0 %399
    %v401 = vperm.slane %v264, 4
    %v402 = vlaneseq
    %v403 = vshrl.u32 %v402, 7
    %405 = vset.pattern.permute.xlu0 %v403
    %406 = vperm.xlu0 %405, %v401
    %v407 = vpop.permute.xlu0 %406
    %v408 = vperm.slane %v264, 5
    %v409 = vlaneseq
    %v410 = vshrl.u32 %v409, 7
    %412 = vset.pattern.permute.xlu0 %v410
    %413 = vperm.xlu0 %412, %v408
    %v414 = vpop.permute.xlu0 %413
    %v415 = vperm.slane %v264, 6
    %v416 = vlaneseq
    %v417 = vshrl.u32 %v416, 7
    %419 = vset.pattern.permute.xlu0 %v417
    %420 = vperm.xlu0 %419, %v415
    %v421 = vpop.permute.xlu0 %420
    %v422 = vperm.slane %v264, 7
    %v423 = vlaneseq
    %v424 = vshrl.u32 %v423, 7
    %426 = vset.pattern.permute.xlu0 %v424
    %427 = vperm.xlu0 %426, %v422
    %v428 = vpop.permute.xlu0 %427
    %v429 = vld [vmem:[#allocation5] sm:$0xff]
    %v430 = vld [vmem:[#allocation5 + $0x8] sm:$0xff]
    %v431 = vld [vmem:[#allocation5 + $0x10] sm:$0xff]
    %v432 = vld [vmem:[#allocation5 + $0x18] sm:$0xff]
    %v433 = vld [vmem:[#allocation5 + $0x20] sm:$0xff]
    %v434 = vld [vmem:[#allocation5 + $0x28] sm:$0xff]
    %v435 = vld [vmem:[#allocation5 + $0x30] sm:$0xff]
    %v436 = vld [vmem:[#allocation5 + $0x38] sm:$0xff]
    %v437 = vld [vmem:[#allocation5 + $0x40] sm:$0xff]
    %v438 = vld [vmem:[#allocation5 + $0x48] sm:$0xff]
    %v439 = vld [vmem:[#allocation5 + $0x50] sm:$0xff]
    %v440 = vld [vmem:[#allocation5 + $0x58] sm:$0xff]
    %v441 = vld [vmem:[#allocation5 + $0x60] sm:$0xff]
    %v442 = vld [vmem:[#allocation5 + $0x68] sm:$0xff]
    %v443 = vld [vmem:[#allocation5 + $0x70] sm:$0xff]
    %v444 = vld [vmem:[#allocation5 + $0x78] sm:$0xff]
    %v445 = vmul.f32 %v323, %v429
    %v446 = vmul.f32 %v330, %v430
    %v447 = vmul.f32 %v337, %v431
    %v448 = vmul.f32 %v344, %v432
    %v449 = vmul.f32 %v351, %v433
    %v450 = vmul.f32 %v358, %v434
    %v451 = vmul.f32 %v365, %v435
    %v452 = vmul.f32 %v372, %v436
    %v453 = vmul.f32 %v379, %v437
    %v454 = vmul.f32 %v386, %v438
    %v455 = vmul.f32 %v393, %v439
    %v456 = vmul.f32 %v400, %v440
    %v457 = vmul.f32 %v407, %v441
    %v458 = vmul.f32 %v414, %v442
    %v459 = vmul.f32 %v421, %v443
    %v460 = vmul.f32 %v428, %v444
    %v461 = vsel %vm216, %v445, 0.0
    %v462 = vrot.slane %v461, 4
    %v463 = vadd.f32 %v461, %v462
    %v464 = vrot.slane %v463, 2
    %v465 = vadd.f32 %v463, %v464
    %v466 = vrot.slane %v465, 1
    %v467 = vadd.f32 %v465, %v466
    %v468 = vsel %vm216, %v446, 0.0
    %v469 = vrot.slane %v468, 4
    %v470 = vadd.f32 %v468, %v469
    %v471 = vrot.slane %v470, 2
    %v472 = vadd.f32 %v470, %v471
    %v473 = vrot.slane %v472, 1
    %v474 = vadd.f32 %v472, %v473
    %v475 = vsel %vm216, %v447, 0.0
    %v476 = vrot.slane %v475, 4
    %v477 = vadd.f32 %v475, %v476
    %v478 = vrot.slane %v477, 2
    %v479 = vadd.f32 %v477, %v478
    %v480 = vrot.slane %v479, 1
    %v481 = vadd.f32 %v479, %v480
    %v482 = vsel %vm216, %v448, 0.0
    %v483 = vrot.slane %v482, 4
    %v484 = vadd.f32 %v482, %v483
    %v485 = vrot.slane %v484, 2
    %v486 = vadd.f32 %v484, %v485
    %v487 = vrot.slane %v486, 1
    %v488 = vadd.f32 %v486, %v487
    %v489 = vsel %vm216, %v449, 0.0
    %v490 = vrot.slane %v489, 4
    %v491 = vadd.f32 %v489, %v490
    %v492 = vrot.slane %v491, 2
    %v493 = vadd.f32 %v491, %v492
    %v494 = vrot.slane %v493, 1
    %v495 = vadd.f32 %v493, %v494
    %v496 = vsel %vm216, %v450, 0.0
    %v497 = vrot.slane %v496, 4
    %v498 = vadd.f32 %v496, %v497
    %v499 = vrot.slane %v498, 2
    %v500 = vadd.f32 %v498, %v499
    %v501 = vrot.slane %v500, 1
    %v502 = vadd.f32 %v500, %v501
    %v503 = vsel %vm216, %v451, 0.0
    %v504 = vrot.slane %v503, 4
    %v505 = vadd.f32 %v503, %v504
    %v506 = vrot.slane %v505, 2
    %v507 = vadd.f32 %v505, %v506
    %v508 = vrot.slane %v507, 1
    %v509 = vadd.f32 %v507, %v508
    %v510 = vsel %vm216, %v452, 0.0
    %v511 = vrot.slane %v510, 4
    %v512 = vadd.f32 %v510, %v511
    %v513 = vrot.slane %v512, 2
    %v514 = vadd.f32 %v512, %v513
    %v515 = vrot.slane %v514, 1
    %v516 = vadd.f32 %v514, %v515
    %v517 = vsel %vm216, %v453, 0.0
    %v518 = vrot.slane %v517, 4
    %v519 = vadd.f32 %v517, %v518
    %v520 = vrot.slane %v519, 2
    %v521 = vadd.f32 %v519, %v520
    %v522 = vrot.slane %v521, 1
    %v523 = vadd.f32 %v521, %v522
    %v524 = vsel %vm216, %v454, 0.0
    %v525 = vrot.slane %v524, 4
    %v526 = vadd.f32 %v524, %v525
    %v527 = vrot.slane %v526, 2
    %v528 = vadd.f32 %v526, %v527
    %v529 = vrot.slane %v528, 1
    %v530 = vadd.f32 %v528, %v529
    %v531 = vsel %vm216, %v455, 0.0
    %v532 = vrot.slane %v531, 4
    %v533 = vadd.f32 %v531, %v532
    %v534 = vrot.slane %v533, 2
    %v535 = vadd.f32 %v533, %v534
    %v536 = vrot.slane %v535, 1
    %v537 = vadd.f32 %v535, %v536
    %v538 = vsel %vm216, %v456, 0.0
    %v539 = vrot.slane %v538, 4
    %v540 = vadd.f32 %v538, %v539
    %v541 = vrot.slane %v540, 2
    %v542 = vadd.f32 %v540, %v541
    %v543 = vrot.slane %v542, 1
    %v544 = vadd.f32 %v542, %v543
    %v545 = vsel %vm216, %v457, 0.0
    %v546 = vrot.slane %v545, 4
    %v547 = vadd.f32 %v545, %v546
    %v548 = vrot.slane %v547, 2
    %v549 = vadd.f32 %v547, %v548
    %v550 = vrot.slane %v549, 1
    %v551 = vadd.f32 %v549, %v550
    %v552 = vsel %vm216, %v458, 0.0
    %v553 = vrot.slane %v552, 4
    %v554 = vadd.f32 %v552, %v553
    %v555 = vrot.slane %v554, 2
    %v556 = vadd.f32 %v554, %v555
    %v557 = vrot.slane %v556, 1
    %v558 = vadd.f32 %v556, %v557
    %v559 = vsel %vm216, %v459, 0.0
    %v560 = vrot.slane %v559, 4
    %v561 = vadd.f32 %v559, %v560
    %v562 = vrot.slane %v561, 2
    %v563 = vadd.f32 %v561, %v562
    %v564 = vrot.slane %v563, 1
    %v565 = vadd.f32 %v563, %v564
    %v566 = vsel %vm216, %v460, 0.0
    %v567 = vrot.slane %v566, 4
    %v568 = vadd.f32 %v566, %v567
    %v569 = vrot.slane %v568, 2
    %v570 = vadd.f32 %v568, %v569
    %v571 = vrot.slane %v570, 1
    %v572 = vadd.f32 %v570, %v571
    %v573 = vperm.slane %v89, 0
    %vm590 = vcmask 1041409
    %v591 = vsel %vm590, %v474, %v467
    %vm592 = vcmask 1042434
    %v593 = vsel %vm592, %v481, %v591
    %vm594 = vcmask 1043459
    %v595 = vsel %vm594, %v488, %v593
    %vm596 = vcmask 1044484
    %v597 = vsel %vm596, %v495, %v595
    %vm598 = vcmask 1045509
    %v599 = vsel %vm598, %v502, %v597
    %vm600 = vcmask 1046534
    %v601 = vsel %vm600, %v509, %v599
    %vm602 = vcmask 1047559
    %v603 = vsel %vm602, %v516, %v601
    %v604 = vsel %vm590, %v530, %v523
    %v605 = vsel %vm592, %v537, %v604
    %v606 = vsel %vm594, %v544, %v605
    %v607 = vsel %vm596, %v551, %v606
    %v608 = vsel %vm598, %v558, %v607
    %v609 = vsel %vm600, %v565, %v608
    %v610 = vsel %vm602, %v572, %v609
    %v611 = vsel %vm216, %v603, 0
    %v613 = vsel %vm216, %v610, 0
    %615 = vmatpush.msra.mxu0 0.0
    %616 = vmatpush.msra.mxu0 0.0
    %617 = vmatpush.msra.mxu0 0.0
    %618 = vmatpush.msra.mxu0 0.0
    %619 = vmatpush.msra.mxu0 0.0
    %620 = vmatpush.msra.mxu0 0.0
    %621 = vmatpush.msra.mxu0 0.0
    %622 = vmatpush.msra.mxu0 0.0
    %623 = vmatpush.msra.mxu0 0.0
    %624 = vmatpush.msra.mxu0 0.0
    %625 = vmatpush.msra.mxu0 0.0
    %626 = vmatpush.msra.mxu0 0.0
    %627 = vmatpush.msra.mxu0 0.0
    %628 = vmatpush.msra.mxu0 0.0
    %629 = vmatpush.msra.mxu0 0.0
    %630 = vmatpush.msra.mxu0 %v83
    %631 = vmatmul.f32.gmra.mxu0 %v611
    %v632 = vpop.f32.mrf.mxu0
    %v633 = vadd.f32 %v573, %v632
    %634 = vmatmul.f32.gmra.mxu0 %v613
    %v635 = vpop.f32.mrf.mxu0
    %v636 = vadd.f32 %v573, %v635
    %637 = vdwg.mxu0
    %v638 = vtanh.pop %v289
    %v639 = vtanh.pop %v315
    %v640 = vtanh.pop %v633
    %v641 = vtanh.pop %v636
    %v643 = vsel %vm96, %v640, 0
    %v646 = vsel %vm96, %v641, 0
    %648 = vmatpush.msra.mxu0 0.0
    %649 = vmatpush.msra.mxu0 0.0
    %650 = vmatpush.msra.mxu0 0.0
    %651 = vmatpush.msra.mxu0 0.0
    %652 = vmatpush.msra.mxu0 0.0
    %653 = vmatpush.msra.mxu0 0.0
    %654 = vmatpush.msra.mxu0 0.0
    %655 = vmatpush.msra.mxu0 0.0
    %656 = vmatpush.msra.mxu0 0.0
    %657 = vmatpush.msra.mxu0 0.0
    %658 = vmatpush.msra.mxu0 0.0
    %659 = vmatpush.msra.mxu0 0.0
    %660 = vmatpush.msra.mxu0 0.0
    %661 = vmatpush.msra.mxu0 0.0
    %662 = vmatpush.msra.mxu0 %v87
    %663 = vmatpush.msra.mxu0 %v86
    %664 = vmatmul.f32.gmra.mxu0 %v643
    %v665 = vpop.f32.mrf.mxu0
    %v666 = vadd.f32 0.0, %v665
    %667 = vmatmul.f32.gmra.mxu0 %v646
    %v668 = vpop.f32.mrf.mxu0
    %v669 = vadd.f32 0.0, %v668
    %670 = vdwg.mxu0
    %v672 = vsel %vm96, %v638, 0
    %v675 = vsel %vm96, %v639, 0
    %677 = vmatpush.msra.mxu0 0.0
    %678 = vmatpush.msra.mxu0 0.0
    %679 = vmatpush.msra.mxu0 0.0
    %680 = vmatpush.msra.mxu0 0.0
    %681 = vmatpush.msra.mxu0 0.0
    %682 = vmatpush.msra.mxu0 0.0
    %683 = vmatpush.msra.mxu0 0.0
    %684 = vmatpush.msra.mxu0 0.0
    %685 = vmatpush.msra.mxu0 0.0
    %686 = vmatpush.msra.mxu0 0.0
    %687 = vmatpush.msra.mxu0 0.0
    %688 = vmatpush.msra.mxu0 0.0
    %689 = vmatpush.msra.mxu0 0.0
    %690 = vmatpush.msra.mxu0 0.0
    %691 = vmatpush.msra.mxu0 %v85
    %692 = vmatpush.msra.mxu0 %v84
    %693 = vmatmul.f32.gmra.mxu0 %v672
    %v694 = vpop.f32.mrf.mxu0
    %v695 = vadd.f32 %v666, %v694
    %696 = vmatmul.f32.gmra.mxu0 %v675
    %v697 = vpop.f32.mrf.mxu0
    %v698 = vadd.f32 %v669, %v697
    %699 = vdwg.mxu0
    %v700 = vperm.slane %v90, 0
    %v701 = vadd.f32 %v695, %v700
    %v702 = vadd.f32 %v698, %v700
    %v703 = vmax.f32 %v701, 0.0
    %v704 = vmax.f32 %v702, 0.0
    %vm705 = vcmask 261120
    %v706 = vsel %vm705, %v703, 0.0
    %v707 = vsel %vm705, %v704, 0.0
    %v708 = vadd.f32 %v706, %v707
    %v709 = vrot.slane %v708, 4
    %v710 = vadd.f32 %v708, %v709
    %v711 = vrot.slane %v710, 2
    %v712 = vadd.f32 %v710, %v711
    %v713 = vrot.slane %v712, 1
    %v714 = vadd.f32 %v712, %v713
    %v715 = vrcp.pop 16.0
    %v716 = vmul.f32 16.0, %v715
    %v717 = vsub.f32 1.0, %v716
    %v718 = vmul.f32 %v715, %v717
    %v719 = vadd.f32 %v715, %v718
    %vm720 = vweird.f32 %v715
    %v721 = vsel %vm720, %v715, %v719
    %v722 = vmul.f32 %v714, %v721
    %v723 = vsub.f32 %v703, %v722
    %v724 = vsub.f32 %v704, %v722
    %v725 = vmul.f32 %v723, %v723
    %v726 = vmul.f32 %v724, %v724
    %v727 = vsel %vm705, %v725, 0.0
    %v728 = vsel %vm705, %v726, 0.0
    %v729 = vadd.f32 %v727, %v728
    %v730 = vrot.slane %v729, 4
    %v731 = vadd.f32 %v729, %v730
    %v732 = vrot.slane %v731, 2
    %v733 = vadd.f32 %v731, %v732
    %v734 = vrot.slane %v733, 1
    %v735 = vadd.f32 %v733, %v734
    %v736 = vmul.f32 %v735, %v721
    %v737 = vadd.f32 %v736, 1e-05
    %v738 = vrsqrt.pop %v737
    %v739 = vmul.f32 %v738, %v737
    %v740 = vmul.f32 %v739, %v738
    %v741 = vmul.f32 0.5, %v740
    %v742 = vsub.f32 1.5, %v741
    %v743 = vmul.f32 %v738, %v742
    %vm744 = vweird.f32 %v737
    %vm745 = vweird.f32 %v738
    %vm746 = vmor %vm744, %vm745
    %v747 = vsel %vm746, %v738, %v743
    %v748 = vmul.f32 %v723, %v747
    %v749 = vmul.f32 %v724, %v747
    %v750 = vperm.slane %v91, 0
    %v751 = vmul.f32 %v748, %v750
    %v752 = vmul.f32 %v749, %v750
    %v753 = vperm.slane %v92, 0
    %v754 = vadd.f32 %v751, %v753
    %v755 = vadd.f32 %v752, %v753
    %756 = vst.msk [vmem:[#allocation10] sm:$0xff] %vm705, %v754
    %757 = vst.msk [vmem:[#allocation10 + $0x8] sm:$0xff] %vm705, %v755
    // Predicated region
    $region34: #{forward.1} parent=1 // pred_check
      _
    $region35: #{forward.1} parent=1 // pred_check_branch
      %759 = sbr.rel (0) target = $region37
    $region36: #{forward.1} parent=1 // pred_region
      %761 = vsyncadd [#allocation4], 0
      %s762 = sshll.u32 [#allocation10], 4
      %s763 = int_to_ptr.vmem [resolvable:$true] %s762
      %s764 = sshll.u32 %s4, 4
      %s765 = int_to_ptr.hbm [resolvable:$true] %s764
      %770 = dma.vmem_to_hbm [thread:$0]  %s763, 256, %s765, [#allocation4], 128, 128, 8
    $region37: #{forward.1} parent=1 // pred_fallthru
      _
    // Predicated region
    $region38: #{forward.1} parent=1 // pred_check
      _
    $region39: #{forward.1} parent=1 // pred_check_branch
      %772 = sbr.rel (0) target = $region41
    $region40: #{forward.1} parent=1 // pred_region
      %774 = dma.done [#allocation4], 256
    $region41: #{forward.1} parent=1 // pred_fallthru
      _
    %775 = vsyncpa [#allocation3], 1
    %776 = vsyncpa [#allocation6], 1
    %777 = vsyncpa [#allocation9], 1
    %778 = vsyncpa [#allocation4], 1

</llo_original>
